<compile_context>
chip_gen: v6e
topology: v6e:2x2x1
jax: 0.10.0
libtpu: 0.0.40
codegen_flags: <defaults>
</compile_context>

<pallas_src>
import functools

import jax
import jax.numpy as jnp
from jax.experimental import pallas as pl
from jax.experimental.pallas import tpu as pltpu

ALPHA = 1.0
GAMMA = 2  # compile-time integer; implemented as a single multiply below


def _round_up(x, m):
    return (x + m - 1) // m * m


def _choose_tile_rows(n, c, itemsize, tile_rows=None):
    """Pick a batch-tile size TN: multiple of 8, ~4 MiB of logits per block,
    but small enough to leave >= ~8 grid tiles for megacore/2-TC sharding."""
    n_pad8 = _round_up(max(n, 1), 8)
    if tile_rows is not None:
        return min(_round_up(tile_rows, 8), n_pad8)
    target_bytes = 4 * 1024 * 1024  # ~4 MiB/block; x2 for double-buffering
    rows = max(8, (target_bytes // max(c * itemsize, 1)) // 8 * 8)
    # Prefer at least ~8 tiles (v7x has 2 TCs; 'parallel' axis shards tiles).
    min_tiles = 8
    rows_for_tiles = max(8, _round_up((n_pad8 + min_tiles - 1) // min_tiles, 8))
    rows = min(rows, rows_for_tiles)
    return min(rows, n_pad8)


def focal_loss_kernel(logits_ref, targets_ref, out_ref, *, n_valid, tile_rows):
    # logits_ref : (TN, C) tile (input dtype; f32 or bf16)
    # targets_ref: (TN, 1) int32 tile
    # out_ref    : (1, 1, 128) f32 lane-dense slab holding this tile's partial sum
    i = pl.program_id(0)
    x = logits_ref[...]            # (TN, C), input dtype
    tn, c = x.shape
    tgt = targets_ref[...]         # (TN, 1) int32

    # pick the target-class logit via a fused iota-compare select (no gather,
    # no materialized one-hot)
    class_ids = jax.lax.broadcasted_iota(jnp.int32, (tn, c), 1)
    logit_t = jnp.sum(
        jnp.where(class_ids == tgt, x, jnp.zeros_like(x)),
        axis=-1, keepdims=True,
    ).astype(jnp.float32)                                        # (TN, 1) f32

    # numerically stable cross entropy; row max in the input dtype, exp in f32
    m = jnp.max(x, axis=-1, keepdims=True)                       # (TN, 1)
    s = jnp.sum(jnp.exp((x - m).astype(jnp.float32)),
                axis=-1, keepdims=True)                          # (TN, 1) f32
    ce = (m.astype(jnp.float32) + jnp.log(s)) - logit_t          # (TN, 1) f32

    # focal: alpha * (1 - pt)^2 * ce   (gamma=2 -> multiply, not pow)
    pt = jnp.exp(-ce)                                            # narrow (TN, 1) exp
    one_minus_pt = 1.0 - pt
    focal = ALPHA * (one_minus_pt * one_minus_pt) * ce           # (TN, 1)

    # mask rows past the true batch size BEFORE summing (the last block may
    # overrun the unpadded logits array; its garbage rows are discarded here)
    row_ids = i * tile_rows + jax.lax.broadcasted_iota(jnp.int32, (tn, 1), 0)
    focal = jnp.where(row_ids < n_valid, focal, 0.0)

    partial = jnp.sum(focal)

    # lane-dense unmasked store: partial sum in lane 0, zeros elsewhere, so the
    # wrapper can jnp.sum() the whole output array.
    lane_ids = jax.lax.broadcasted_iota(jnp.int32, out_ref.shape, out_ref.ndim - 1)
    out_ref[...] = jnp.where(lane_ids == 0, partial, 0.0).astype(out_ref.dtype)


def focal_loss(logits, targets, tile_rows=None):
    """logits: (N, C) float (f32 or bf16); targets: (N,) int class indices.
    Returns the scalar mean focal loss (alpha=1, gamma=2, reduction='mean')."""
    n, c = logits.shape
    itemsize = jnp.dtype(logits.dtype).itemsize
    tn = _choose_tile_rows(n, c, itemsize, tile_rows)
    num_tiles = pl.cdiv(n, tn)
    padded_n = num_tiles * tn

    targets_2d = targets.reshape(n, 1).astype(jnp.int32)
    if padded_n != n:
        # tiny int32 pad only; logits are NOT padded (no extra HBM pass) — the
        # overrunning last block is masked in-kernel.
        targets_2d = jnp.pad(targets_2d, ((0, padded_n - n), (0, 0)))

    kernel = functools.partial(focal_loss_kernel, n_valid=n, tile_rows=tn)

    partials = pl.pallas_call(
        kernel,
        out_shape=jax.ShapeDtypeStruct((num_tiles, 1, 128), jnp.float32),
        grid_spec=pltpu.PrefetchScalarGridSpec(
            num_scalar_prefetch=0,
            grid=(num_tiles,),
            in_specs=[
                # (TN, C) logits tile per grid step (double-buffered pipeline)
                pl.BlockSpec((tn, c), lambda i: (i, 0)),
                # (TN, 1) targets tile per grid step (tiny, overlapped DMA)
                pl.BlockSpec((tn, 1), lambda i: (i, 0)),
            ],
            out_specs=pl.BlockSpec((1, 1, 128), lambda i: (i, 0, 0)),
        ),
        compiler_params=pltpu.CompilerParams(
            dimension_semantics=("parallel",),
            vmem_limit_bytes=48 * 1024 * 1024,
        ),
    )(logits, targets_2d)

    total = jnp.sum(partials)
    return total / jnp.float32(n)  # reduction='mean'


def focal_loss_ref(logits, targets):
    # pure-JAX reference (mirrors F.cross_entropy(..., reduction='none') + focal)
    logp = jax.nn.log_softmax(logits.astype(jnp.float32), axis=-1)
    ce = -jnp.take_along_axis(logp, targets[:, None].astype(jnp.int32), axis=-1)[:, 0]
    pt = jnp.exp(-ce)
    return jnp.mean(ALPHA * (1.0 - pt) ** 2 * ce)


if __name__ == "__main__":
    key = jax.random.PRNGKey(0)
    k1, k2, k3, k4 = jax.random.split(key, 4)

    # Case 1: small shape from the module spec (batch=8, classes=32) — single tile.
    N, C = 8, 32
    logits = jax.random.normal(k1, (N, C), dtype=jnp.float32)
    targets = jax.random.randint(k2, (N,), 0, C, dtype=jnp.int32)
    out = focal_loss(logits, targets)
    jax.block_until_ready(out)
    ref = focal_loss_ref(logits, targets)
    assert jnp.allclose(out, ref, rtol=1e-5, atol=1e-5), (out, ref)

    # Case 2: multi-tile grid with an overrunning (masked) last tile
    # (N=40, TN=16 -> 3 tiles, last tile has 8 valid rows).
    N2, C2 = 40, 32
    logits2 = jax.random.normal(k3, (N2, C2), dtype=jnp.float32)
    targets2 = jax.random.randint(k4, (N2,), 0, C2, dtype=jnp.int32)
    out2 = focal_loss(logits2, targets2, tile_rows=16)
    jax.block_until_ready(out2)
    ref2 = focal_loss_ref(logits2, targets2)
    assert jnp.allclose(out2, ref2, rtol=1e-5, atol=1e-5), (out2, ref2)

    print("KERNEL_OK")
</pallas_src>

<mosaic_0001>
module attributes {stable_mosaic.version = 11 : i64} {
  func.func @focal_loss_kernel(%arg0: i32, %arg1: memref<8x32xf32, #tpu.memory_space<vmem>>, %arg2: memref<8x1xi32, #tpu.memory_space<vmem>>, %arg3: memref<1x1x128xf32, #tpu.memory_space<vmem>>) attributes {dimension_semantics = [#tpu.dimension_semantics<parallel>], iteration_bounds = array<i64: 1>, scalar_prefetch = 0 : i64, scratch_operands = 0 : i64, tpu.core_type = #tpu.core_type<tc>, window_params = [{transform_indices = @transform_0, window_bounds = array<i64: 8, 32>}, {transform_indices = @transform_1, window_bounds = array<i64: 8, 1>}, {transform_indices = @transform_2, window_bounds = array<i64: 1, 1, 128>}]} {
    %c0 = arith.constant 0 : index
    %c0_0 = arith.constant 0 : index
    %0 = vector.load %arg1[%c0, %c0_0] : memref<8x32xf32, #tpu.memory_space<vmem>>, vector<8x32xf32>
    %c0_1 = arith.constant 0 : index
    %c0_2 = arith.constant 0 : index
    %1 = vector.load %arg2[%c0_1, %c0_2] : memref<8x1xi32, #tpu.memory_space<vmem>>, vector<8x1xi32>
    %2 = tpu.iota {dimensions = array<i32: 1>} : vector<8x32xi32>
    %3 = vector.broadcast %1 : vector<8x1xi32> to vector<8x32xi32>
    %4 = arith.cmpi eq, %2, %3 : vector<8x32xi32>
    %cst = arith.constant 0.000000e+00 : f32
    %5 = vector.broadcast %cst : f32 to vector<8x32xf32>
    %6 = arith.select %4, %0, %5 : vector<8x32xi1>, vector<8x32xf32>
    %cst_3 = arith.constant dense<0.000000e+00> : vector<8xf32>
    %7 = vector.multi_reduction <add>, %6, %cst_3 [1] : vector<8x32xf32> to vector<8xf32>
    %8 = vector.shape_cast %7 : vector<8xf32> to vector<8x1xf32>
    %cst_4 = arith.constant dense<0xFF800000> : vector<8xf32>
    %9 = vector.multi_reduction <maximumf>, %0, %cst_4 [1] : vector<8x32xf32> to vector<8xf32>
    %10 = vector.shape_cast %9 : vector<8xf32> to vector<8x1xf32>
    %11 = vector.broadcast %10 : vector<8x1xf32> to vector<8x32xf32>
    %12 = arith.subf %0, %11 : vector<8x32xf32>
    %13 = math.exp %12 : vector<8x32xf32>
    %cst_5 = arith.constant dense<0.000000e+00> : vector<8xf32>
    %14 = vector.multi_reduction <add>, %13, %cst_5 [1] : vector<8x32xf32> to vector<8xf32>
    %15 = vector.shape_cast %14 : vector<8xf32> to vector<8x1xf32>
    %16 = math.log %15 : vector<8x1xf32>
    %17 = arith.addf %10, %16 : vector<8x1xf32>
    %18 = arith.subf %17, %8 : vector<8x1xf32>
    %cst_6 = arith.constant 0.000000e+00 : f32
    %19 = vector.broadcast %cst_6 : f32 to vector<8x1xf32>
    %20 = arith.subf %19, %18 : vector<8x1xf32>
    %21 = math.exp %20 : vector<8x1xf32>
    %cst_7 = arith.constant 1.000000e+00 : f32
    %22 = vector.broadcast %cst_7 : f32 to vector<8x1xf32>
    %23 = arith.subf %22, %21 : vector<8x1xf32>
    %24 = arith.mulf %23, %23 : vector<8x1xf32>
    %cst_8 = arith.constant 1.000000e+00 : f32
    %25 = vector.broadcast %cst_8 : f32 to vector<8x1xf32>
    %26 = arith.mulf %25, %24 : vector<8x1xf32>
    %27 = arith.mulf %26, %18 : vector<8x1xf32>
    %c8_i32 = arith.constant 8 : i32
    %28 = arith.muli %arg0, %c8_i32 : i32
    %29 = tpu.iota {dimensions = array<i32: 0>} : vector<8x1xi32>
    %30 = vector.broadcast %28 : i32 to vector<8x1xi32>
    %31 = arith.addi %30, %29 : vector<8x1xi32>
    %c8_i32_9 = arith.constant 8 : i32
    %32 = vector.broadcast %c8_i32_9 : i32 to vector<8x1xi32>
    %33 = arith.cmpi slt, %31, %32 : vector<8x1xi32>
    %cst_10 = arith.constant 0.000000e+00 : f32
    %34 = vector.broadcast %cst_10 : f32 to vector<8x1xf32>
    %35 = arith.select %33, %27, %34 : vector<8x1xi1>, vector<8x1xf32>
    %36 = vector.shape_cast %35 : vector<8x1xf32> to vector<1x8x1xf32>
    %cst_11 = arith.constant dense<0.000000e+00> : vector<1xf32>
    %37 = vector.multi_reduction <add>, %36, %cst_11 [1, 2] : vector<1x8x1xf32> to vector<1xf32>
    %38 = vector.shape_cast %37 : vector<1xf32> to vector<1x1x1xf32>
    %39 = vector.extract %38[0, 0, 0] : f32 from vector<1x1x1xf32>
    %40 = tpu.iota {dimensions = array<i32: 2>} : vector<1x1x128xi32>
    %c0_i32 = arith.constant 0 : i32
    %41 = vector.broadcast %c0_i32 : i32 to vector<1x1x128xi32>
    %42 = arith.cmpi eq, %40, %41 : vector<1x1x128xi32>
    %cst_12 = arith.constant 0.000000e+00 : f32
    %43 = vector.broadcast %39 : f32 to vector<1x1x128xf32>
    %44 = vector.broadcast %cst_12 : f32 to vector<1x1x128xf32>
    %45 = arith.select %42, %43, %44 : vector<1x1x128xi1>, vector<1x1x128xf32>
    %c0_13 = arith.constant 0 : index
    %c0_14 = arith.constant 0 : index
    %c0_15 = arith.constant 0 : index
    %46 = vector.load %arg3[%c0_13, %c0_14, %c0_15] : memref<1x1x128xf32, #tpu.memory_space<vmem>>, vector<1x1x128xf32>
    tpu.vector_store %arg3[%c0_13, %c0_14, %c0_15], %45 {strides = array<i32>} : memref<1x1x128xf32, #tpu.memory_space<vmem>>, vector<1x1x128xf32>,
    return
  }
  func.func @transform_0(%arg0: i32) -> (i32, i32) {
    %c0_i32 = arith.constant 0 : i32
    %c0_i32_0 = arith.constant 0 : i32
    return %arg0, %c0_i32 : i32, i32
  }
  func.func @transform_1(%arg0: i32) -> (i32, i32) {
    %c0_i32 = arith.constant 0 : i32
    %c0_i32_0 = arith.constant 0 : i32
    return %arg0, %c0_i32 : i32, i32
  }
  func.func @transform_2(%arg0: i32) -> (i32, i32, i32) {
    %c0_i32 = arith.constant 0 : i32
    %c0_i32_0 = arith.constant 0 : i32
    %c0_i32_1 = arith.constant 0 : i32
    return %arg0, %c0_i32, %c0_i32_0 : i32, i32, i32
  }
}

</mosaic_0001>

<llo_original>
// kernel: tpu_custom_call.1
$region0: #{tpu_custom_call.1}
  #allocation0 [shape = 'u32[]', space=smem, size = 0x4, offset = 0x4, fixed_abs, tag = 'smem constant byte address 0x4 - core index']
  #allocation1 [shape = 'u32[144,128]{1,0:T(1,128)}', space=vmem, size = 0x12000, scoped, tag = 'internal scratch']
  %s0 = inlined_call_operand.vmem [shape: f32[8,32], index: 0, kind: input, shape index: {}]
  %s1 = inlined_call_operand.vmem [shape: s32[8,1], index: 1, kind: input, shape index: {}]
  %s2 = inlined_call_operand.hbm [shape: f32[1,1,128], index: 2, kind: output, shape index: {}]
  %s3 = sld [smem:[#allocation0]]
  $region18: #{tpu_custom_call.1} parent=0
    _
  %s5 = ssub.s32 1, %s3
  %s6 = scalar_select 0, %s5, %s3
  $region1: #{tpu_custom_call.1} parent=0
    #allocation2 [shape = 'u8[512]{0}', space=vmem, size = 0x400, scoped, tag = 'output window, operand 0, single buffered']
    #allocation3 [shape = 's32[1]{0}', space=sflag, size = 0x4, scoped, tag = 'scoped memory for tpu_custom_call.1']
    %7 = vsyncpa [#allocation3], 0
    // Predicated region
    $region2: #{tpu_custom_call.1} parent=1 // pred_check
      _
    $region3: #{tpu_custom_call.1} parent=1 // pred_check_branch
      %9 = sbr.rel (0) target = $region5
    $region4: #{tpu_custom_call.1} parent=1 // pred_region
      _
    $region5: #{tpu_custom_call.1} parent=1 // pred_fallthru
      _
    // Predicated region
    $region6: #{tpu_custom_call.1} parent=1 // pred_check
      _
    $region7: #{tpu_custom_call.1} parent=1 // pred_check_branch
      %11 = sbr.rel (0) target = $region9
    $region8: #{tpu_custom_call.1} parent=1 // pred_region
      _
    $region9: #{tpu_custom_call.1} parent=1 // pred_fallthru
      _
    %v12 = vld [vmem:[%s0] sm:$0xff]
    %v13 = vld [vmem:[%s1] sm:$0xff]
    %v14 = vlaneseq
    %v15 = vand.u32 %v14, 127
    %16 = vset.pattern.permute.xlu0 0
    %17 = vperm.xlu0 %16, %v13
    %v18 = vpop.permute.xlu0 %17
    %vm19 = vcmp.eq.s32.totalorder %v15, %v18
    %v20 = vsel %vm19, %v12, 0.0
    %vm21 = vcmask 261120
    %v22 = vsel %vm21, %v20, 0.0
    %23 = vadd.xlane.f32.xlu0 %v22
    %v24 = vpop.xlane.xlu0 %23
    %v25 = vsel %vm21, %v12, -inf
    %26 = vmax.xlane.f32.xlu0 %v25
    %v27 = vpop.xlane.xlu0 %26
    %v28 = vsub.f32 %v12, %v27
    %v29 = vmul.f32 %v28, 1.442695
    %v30 = vpow.pop %v29
    %v31 = vsel %vm21, %v30, 0.0
    %32 = vadd.xlane.f32.xlu0 %v31
    %v33 = vpop.xlane.xlu0 %32
    %v34 = vlog2.pop %v33
    %v35 = vmul.f32 %v34, 0.6931472
    %v36 = vadd.f32 %v27, %v35
    %v37 = vsub.f32 %v36, %v24
    %v38 = vsub.f32 0.0, %v37
    %v39 = vmul.f32 %v38, 1.442695
    %v40 = vpow.pop %v39
    %v41 = vsub.f32 1.0, %v40
    %v42 = vmul.f32 %v41, %v41
    %v43 = vmul.f32 %v42, %v37
    %s44 = smul.u32 0, 8
    %v45 = vlaneseq
    %v46 = vshrl.u32 %v45, 7
    %v47 = vstv %s44
    %v48 = vadd.s32 %v47, %v46
    %vm49 = vcmp.lt.s32.totalorder %v48, 8
    %v50 = vsel %vm49, %v43, 0.0
    %vm51 = vcmask 7168
    %v52 = vsel %vm51, %v50, 0.0
    %53 = vadd.xlane.f32.xlu0 %v52
    %v54 = vpop.xlane.xlu0 %53
    %v55 = vrot.slane %v54, 4
    %v56 = vadd.f32 %v54, %v55
    %v57 = vrot.slane %v56, 2
    %v58 = vadd.f32 %v56, %v57
    %v59 = vrot.slane %v58, 1
    %v60 = vadd.f32 %v58, %v59
    %s61 = vtos %v60
    %vm62 = vcmp.eq.s32.totalorder %v15, 0
    %v63 = vstv %s61
    %v64 = vsel %vm62, %v63, 0.0
    %65 = vst [vmem:[#allocation2] sm:$0x1] %v64
    // Predicated region
    $region10: #{tpu_custom_call.1} parent=1 // pred_check
      _
    $region11: #{tpu_custom_call.1} parent=1 // pred_check_branch
      %67 = sbr.rel (0) target = $region13
    $region12: #{tpu_custom_call.1} parent=1 // pred_region
      %s69 = ssub.s32 16, 16
      %70 = vsyncadd [#allocation3], %s69
      %s72 = sshll.u32 [#allocation2], 4
      %s73 = int_to_ptr.vmem [resolvable:$true] %s72
      %75 = dma.vmem_to_hbm [thread:$0]  %s73, 16, %s2, [#allocation3]
    $region13: #{tpu_custom_call.1} parent=1 // pred_fallthru
      _
    // Predicated region
    $region14: #{tpu_custom_call.1} parent=1 // pred_check
      _
    $region15: #{tpu_custom_call.1} parent=1 // pred_check_branch
      %77 = sbr.rel (0) target = $region17
    $region16: #{tpu_custom_call.1} parent=1 // pred_region
      %78 = dma.done [#allocation3], 16
    $region17: #{tpu_custom_call.1} parent=1 // pred_fallthru
      _
    %79 = vsyncpa [#allocation3], 1

</llo_original>
